<compile_context>
chip_gen: v7x
topology: tpu7x:2x2x1
jax: 0.10.0
libtpu: 0.0.40
codegen_flags: <defaults>
</compile_context>

<pallas_src>
import jax
import jax.numpy as jnp
from jax.experimental import pallas as pl
from jax.experimental.pallas import tpu as pltpu


def _round_up(n: int, m: int) -> int:
    return ((n + m - 1) // m) * m


def _discriminator_kernel(x_ref, w_ref, b_ref, o_ref):
    # x_ref: [TILE_B, 1024] VMEM   w_ref: [1, 1024] VMEM (resident across grid)
    # b_ref: [1] SMEM              o_ref: [1, TILE_B] VMEM (lane-dense row)
    K = x_ref.shape[1]
    CH = 128  # one vreg of lanes per chunk
    # Accumulate K in 128-lane chunks: never materializes the full [TILE_B, K]
    # product and leaves a single 128-wide XLU lane reduce at the end.
    partial = x_ref[:, 0:CH] * w_ref[:, 0:CH]
    for k in range(1, K // CH):
        partial = partial + x_ref[:, k * CH:(k + 1) * CH] * w_ref[:, k * CH:(k + 1) * CH]
    acc = jnp.sum(partial, axis=-1)          # XLU lane reduce -> [TILE_B]
    logits = acc + b_ref[0]                  # scalar bias from SMEM
    o_ref[...] = jax.nn.sigmoid(logits)[None, :].astype(o_ref.dtype)


def discriminator_forward(x, w, b, *, tile_b: int = 2048, min_kernel_batch: int = 256):
    """x: [B, 1024] f32, w: [1024, 1] f32, b: [1] f32 -> sigmoid(x @ w + b): [B, 1]."""
    B, K = x.shape
    assert K == 1024, "Discriminator expects 1024 input features"

    w_f32 = w.astype(jnp.float32)
    b_f32 = b.astype(jnp.float32)

    # Tiny batches: the call would be 100% launch/DMA-setup latency. Let XLA
    # fuse the 4 KiB GEMV + sigmoid into the producing graph instead.
    if B < min_kernel_batch:
        logits = jnp.dot(x.astype(jnp.float32), w_f32.reshape(K, 1),
                         preferred_element_type=jnp.float32) + b_f32.reshape(1, 1)
        return jax.nn.sigmoid(logits)

    # Batch tile: multiple of 8 (sublane), capped at tile_b and at 4096 (v7x
    # has only 64 MiB VMEM per TC).
    tb = min(_round_up(tile_b, 8), _round_up(B, 8), 4096)
    # Guarantee >= 2 grid tiles for mid/large batches so the "parallel" batch
    # axis actually splits across both v7x TensorCores (no-op on v5e/v6e).
    if B >= 512:
        tb = min(tb, _round_up(pl.cdiv(B, 2), 8))
    num_tiles = pl.cdiv(B, tb)

    tile_bytes = tb * K * 4
    # Triple-buffer the x stream when it is cheap and the grid is deep enough
    # to benefit; otherwise standard double-buffering.
    buffers = 3 if (num_tiles >= 3 and tile_bytes <= (8 << 20)) else 2
    # Explicit scoped-VMEM budget: covers v5e's 16 MiB default when tiles grow,
    # stays well under v7x's 64 MiB physical per-TC VMEM.
    vmem_limit_bytes = max(buffers * tile_bytes + (8 << 20), 32 << 20)

    w_row = w_f32.reshape(1, K)            # lane-major weight row
    b1 = b_f32.reshape(1)

    cost = pl.CostEstimate(
        flops=2 * B * K,
        transcendentals=B,
        bytes_accessed=4 * B * K + 4 * K + 4 * B,
    )

    out = pl.pallas_call(
        _discriminator_kernel,
        out_shape=jax.ShapeDtypeStruct((num_tiles, tb), jnp.float32),
        grid=(num_tiles,),
        in_specs=[
            pl.BlockSpec((tb, K), lambda i: (i, 0),
                         pipeline_mode=pl.Buffered(buffers)),   # stream x tiles
            pl.BlockSpec((1, K), lambda i: (0, 0)),             # weight resident
            pl.BlockSpec(memory_space=pltpu.MemorySpace.SMEM),  # bias scalar
        ],
        out_specs=pl.BlockSpec((1, tb), lambda i: (i, 0)),      # lane-dense rows
        compiler_params=pltpu.CompilerParams(
            dimension_semantics=("parallel",),
            vmem_limit_bytes=vmem_limit_bytes,
        ),
        cost_estimate=cost,
    )(x.astype(jnp.float32), w_row, b1)

    # Undo lane-dense packing; drop rows coming from the ragged last tile.
    return out.reshape(num_tiles * tb)[:B].reshape(B, 1)


if __name__ == "__main__":
    key = jax.random.PRNGKey(0)
    kx, kw, kb = jax.random.split(key, 3)

    # Small shapes consistent with the module: Linear(1024, 1) on flattened features.
    B = 8
    x = jax.random.normal(kx, (B, 1024), dtype=jnp.float32)
    w = jax.random.normal(kw, (1024, 1), dtype=jnp.float32) * 0.02
    b = jax.random.normal(kb, (1,), dtype=jnp.float32) * 0.02

    ref = jax.nn.sigmoid(
        jnp.dot(x, w, precision=jax.lax.Precision.HIGHEST) + b.reshape(1, 1)
    )

    # 1) Default dispatch: tiny batch takes the fused jnp path.
    out_small = jax.block_until_ready(discriminator_forward(x, w, b))
    assert out_small.shape == (B, 1)
    assert jnp.allclose(out_small, ref, atol=1e-5, rtol=1e-5)

    # 2) Force the Pallas kernel at the tiny shape (grid = 1, tb = 8).
    out_kernel = jax.block_until_ready(
        discriminator_forward(x, w, b, min_kernel_batch=0)
    )
    assert out_kernel.shape == (B, 1)
    assert jnp.allclose(out_kernel, ref, atol=1e-5, rtol=1e-5)

    # 3) Exercise the tiled kernel path: grid > 1 with a ragged last tile.
    B2 = 272
    x2 = jax.random.normal(kx, (B2, 1024), dtype=jnp.float32)
    out2 = jax.block_until_ready(
        discriminator_forward(x2, w, b, tile_b=128, min_kernel_batch=0)
    )
    ref2 = jax.nn.sigmoid(
        jnp.dot(x2, w, precision=jax.lax.Precision.HIGHEST) + b.reshape(1, 1)
    )
    assert out2.shape == (B2, 1)
    assert jnp.allclose(out2, ref2, atol=1e-5, rtol=1e-5)

    print("KERNEL_OK")
</pallas_src>

<mosaic_0001>
module attributes {stable_mosaic.version = 11 : i64} {
  func.func @_discriminator_kernel(%arg0: i32, %arg1: memref<8x1024xf32, #tpu.memory_space<vmem>>, %arg2: memref<1x1024xf32, #tpu.memory_space<vmem>>, %arg3: memref<1xf32, #tpu.memory_space<smem>>, %arg4: memref<1x8xf32, #tpu.memory_space<vmem>>) attributes {dimension_semantics = [#tpu.dimension_semantics<parallel>], iteration_bounds = array<i64: 1>, scalar_prefetch = 0 : i64, scratch_operands = 0 : i64, tpu.core_type = #tpu.core_type<tc>, window_params = [{pipeline_mode = #tpu.pipeline_mode<double_buffered>, transform_indices = @transform_0, window_bounds = array<i64: 8, 1024>}, {pipeline_mode = #tpu.pipeline_mode<synchronous>, transform_indices = @transform_1, window_bounds = array<i64: 1, 1024>}, {transform_indices = @transform_2, window_bounds = array<i64: 1>}, {transform_indices = @transform_3, window_bounds = array<i64: 1, 8>}]} {
    %c0 = arith.constant 0 : index
    %c0_0 = arith.constant 0 : index
    %0 = vector.load %arg1[%c0, %c0_0] : memref<8x1024xf32, #tpu.memory_space<vmem>>, vector<8x128xf32>
    %c0_1 = arith.constant 0 : index
    %c0_2 = arith.constant 0 : index
    %1 = vector.load %arg2[%c0_1, %c0_2] : memref<1x1024xf32, #tpu.memory_space<vmem>>, vector<1x128xf32>
    %2 = vector.broadcast %1 : vector<1x128xf32> to vector<8x128xf32>
    %3 = arith.mulf %0, %2 : vector<8x128xf32>
    %c0_3 = arith.constant 0 : index
    %c128 = arith.constant 128 : index
    %4 = vector.load %arg1[%c0_3, %c128] : memref<8x1024xf32, #tpu.memory_space<vmem>>, vector<8x128xf32>
    %c0_4 = arith.constant 0 : index
    %c128_5 = arith.constant 128 : index
    %5 = vector.load %arg2[%c0_4, %c128_5] : memref<1x1024xf32, #tpu.memory_space<vmem>>, vector<1x128xf32>
    %6 = vector.broadcast %5 : vector<1x128xf32> to vector<8x128xf32>
    %7 = arith.mulf %4, %6 : vector<8x128xf32>
    %8 = arith.addf %3, %7 : vector<8x128xf32>
    %c0_6 = arith.constant 0 : index
    %c256 = arith.constant 256 : index
    %9 = vector.load %arg1[%c0_6, %c256] : memref<8x1024xf32, #tpu.memory_space<vmem>>, vector<8x128xf32>
    %c0_7 = arith.constant 0 : index
    %c256_8 = arith.constant 256 : index
    %10 = vector.load %arg2[%c0_7, %c256_8] : memref<1x1024xf32, #tpu.memory_space<vmem>>, vector<1x128xf32>
    %11 = vector.broadcast %10 : vector<1x128xf32> to vector<8x128xf32>
    %12 = arith.mulf %9, %11 : vector<8x128xf32>
    %13 = arith.addf %8, %12 : vector<8x128xf32>
    %c0_9 = arith.constant 0 : index
    %c384 = arith.constant 384 : index
    %14 = vector.load %arg1[%c0_9, %c384] : memref<8x1024xf32, #tpu.memory_space<vmem>>, vector<8x128xf32>
    %c0_10 = arith.constant 0 : index
    %c384_11 = arith.constant 384 : index
    %15 = vector.load %arg2[%c0_10, %c384_11] : memref<1x1024xf32, #tpu.memory_space<vmem>>, vector<1x128xf32>
    %16 = vector.broadcast %15 : vector<1x128xf32> to vector<8x128xf32>
    %17 = arith.mulf %14, %16 : vector<8x128xf32>
    %18 = arith.addf %13, %17 : vector<8x128xf32>
    %c0_12 = arith.constant 0 : index
    %c512 = arith.constant 512 : index
    %19 = vector.load %arg1[%c0_12, %c512] : memref<8x1024xf32, #tpu.memory_space<vmem>>, vector<8x128xf32>
    %c0_13 = arith.constant 0 : index
    %c512_14 = arith.constant 512 : index
    %20 = vector.load %arg2[%c0_13, %c512_14] : memref<1x1024xf32, #tpu.memory_space<vmem>>, vector<1x128xf32>
    %21 = vector.broadcast %20 : vector<1x128xf32> to vector<8x128xf32>
    %22 = arith.mulf %19, %21 : vector<8x128xf32>
    %23 = arith.addf %18, %22 : vector<8x128xf32>
    %c0_15 = arith.constant 0 : index
    %c640 = arith.constant 640 : index
    %24 = vector.load %arg1[%c0_15, %c640] : memref<8x1024xf32, #tpu.memory_space<vmem>>, vector<8x128xf32>
    %c0_16 = arith.constant 0 : index
    %c640_17 = arith.constant 640 : index
    %25 = vector.load %arg2[%c0_16, %c640_17] : memref<1x1024xf32, #tpu.memory_space<vmem>>, vector<1x128xf32>
    %26 = vector.broadcast %25 : vector<1x128xf32> to vector<8x128xf32>
    %27 = arith.mulf %24, %26 : vector<8x128xf32>
    %28 = arith.addf %23, %27 : vector<8x128xf32>
    %c0_18 = arith.constant 0 : index
    %c768 = arith.constant 768 : index
    %29 = vector.load %arg1[%c0_18, %c768] : memref<8x1024xf32, #tpu.memory_space<vmem>>, vector<8x128xf32>
    %c0_19 = arith.constant 0 : index
    %c768_20 = arith.constant 768 : index
    %30 = vector.load %arg2[%c0_19, %c768_20] : memref<1x1024xf32, #tpu.memory_space<vmem>>, vector<1x128xf32>
    %31 = vector.broadcast %30 : vector<1x128xf32> to vector<8x128xf32>
    %32 = arith.mulf %29, %31 : vector<8x128xf32>
    %33 = arith.addf %28, %32 : vector<8x128xf32>
    %c0_21 = arith.constant 0 : index
    %c896 = arith.constant 896 : index
    %34 = vector.load %arg1[%c0_21, %c896] : memref<8x1024xf32, #tpu.memory_space<vmem>>, vector<8x128xf32>
    %c0_22 = arith.constant 0 : index
    %c896_23 = arith.constant 896 : index
    %35 = vector.load %arg2[%c0_22, %c896_23] : memref<1x1024xf32, #tpu.memory_space<vmem>>, vector<1x128xf32>
    %36 = vector.broadcast %35 : vector<1x128xf32> to vector<8x128xf32>
    %37 = arith.mulf %34, %36 : vector<8x128xf32>
    %38 = arith.addf %33, %37 : vector<8x128xf32>
    %cst = arith.constant dense<0.000000e+00> : vector<8xf32>
    %39 = vector.multi_reduction <add>, %38, %cst [1] : vector<8x128xf32> to vector<8xf32>
    %c0_24 = arith.constant 0 : index
    %40 = memref.load %arg3[%c0_24] : memref<1xf32, #tpu.memory_space<smem>>
    %41 = vector.broadcast %40 : f32 to vector<8xf32>
    %42 = arith.addf %39, %41 : vector<8xf32>
    %43 = arith.negf %42 : vector<8xf32>
    %44 = math.exp %43 : vector<8xf32>
    %cst_25 = arith.constant 1.000000e+00 : f32
    %45 = vector.broadcast %cst_25 : f32 to vector<8xf32>
    %46 = arith.addf %45, %44 : vector<8xf32>
    %47 = arith.divf %45, %46 : vector<8xf32>
    %48 = vector.shape_cast %47 : vector<8xf32> to vector<1x8xf32>
    %c0_26 = arith.constant 0 : index
    %c0_27 = arith.constant 0 : index
    %49 = vector.load %arg4[%c0_26, %c0_27] : memref<1x8xf32, #tpu.memory_space<vmem>>, vector<1x8xf32>
    tpu.vector_store %arg4[%c0_26, %c0_27], %48 {strides = array<i32>} : memref<1x8xf32, #tpu.memory_space<vmem>>, vector<1x8xf32>,
    return
  }
  func.func @transform_0(%arg0: i32) -> (i32, i32) {
    %c0_i32 = arith.constant 0 : i32
    %c0_i32_0 = arith.constant 0 : i32
    return %arg0, %c0_i32 : i32, i32
  }
  func.func @transform_1(%arg0: i32) -> (i32, i32) {
    %c0_i32 = arith.constant 0 : i32
    %c0_i32_0 = arith.constant 0 : i32
    %c0_i32_1 = arith.constant 0 : i32
    return %c0_i32, %c0_i32_0 : i32, i32
  }
  func.func @transform_2(%arg0: i32) -> i32 {
    %c0_i32 = arith.constant 0 : i32
    %c0_i32_0 = arith.constant 0 : i32
    return %c0_i32 : i32
  }
  func.func @transform_3(%arg0: i32) -> (i32, i32) {
    %c0_i32 = arith.constant 0 : i32
    %c0_i32_0 = arith.constant 0 : i32
    return %arg0, %c0_i32 : i32, i32
  }
}

</mosaic_0001>

<llo_original>
// kernel: tpu_custom_call.1
$region0: #{tpu_custom_call.1}
  #allocation0 [shape = 'u32[]', space=smem, size = 0x4, offset = 0x4, fixed_abs, tag = 'smem constant byte address 0x4 - core index']
  #allocation1 [shape = 'u32[144,128]{1,0:T(1,128)}', space=vmem, size = 0x12000, scoped, tag = 'internal scratch']
  #allocation2 [shape = 'f32[1]{0:T(128)S(6)}', space=smem, size = 0x200, scoped, tag = 'scoped memory for tpu_custom_call.1']
  %s0 = inlined_call_operand.hbm [shape: f32[8,1024], index: 0, kind: input, shape index: {}]
  %s1 = inlined_call_operand.hbm [shape: f32[1,1024], index: 1, kind: input, shape index: {}]
  %s2 = inlined_call_operand.<no memory space> [shape: f32[1], index: 2, kind: input, shape index: {}]
  %s3 = inlined_call_operand.hbm [shape: f32[1,8], index: 3, kind: output, shape index: {}]
  %s4 = sld [smem:[#allocation0]]
  $region30: #{tpu_custom_call.1} parent=0
    _
  %s6 = ssub.s32 1, %s4
  %s7 = scalar_select 0, %s6, %s4
  %8 = sst [smem:[#allocation2]] %s2
  $region1: #{tpu_custom_call.1} parent=0
    #allocation3 [shape = 'u8[32768]{0}', space=vmem, size = 0x8000, scoped, tag = 'input window, operand 0, single buffered']
    #allocation4 [shape = 's32[1]{0}', space=sflag, size = 0x4, scoped, tag = 'scoped memory for tpu_custom_call.1']
    #allocation5 [shape = 's32[1]{0}', space=sflag, size = 0x4, scoped, tag = 'scoped memory for tpu_custom_call.1']
    #allocation6 [shape = 'u8[4096]{0}', space=vmem, size = 0x1000, scoped, tag = 'input window, operand 1, single buffered']
    #allocation7 [shape = 's32[1]{0}', space=sflag, size = 0x4, scoped, tag = 'scoped memory for tpu_custom_call.1']
    #allocation8 [shape = 'u8[512]{0}', space=vmem, size = 0x400, scoped, tag = 'output window, operand 0, single buffered']
    %9 = vsyncpa [#allocation4], 0
    %10 = vsyncpa [#allocation7], 0
    %11 = vsyncpa [#allocation5], 0
    // Predicated region
    $region2: #{tpu_custom_call.1} parent=1 // pred_check
      _
    $region3: #{tpu_custom_call.1} parent=1 // pred_check_branch
      %13 = sbr.rel (0) target = $region5
    $region4: #{tpu_custom_call.1} parent=1 // pred_region
      %s15 = ssub.s32 1024, 1024
      %16 = vsyncadd [#allocation4], %s15
      %s18 = sshll.u32 [#allocation3], 4
      %s19 = int_to_ptr.vmem [resolvable:$true] %s18
      %21 = dma.hbm_to_vmem [thread:$0]  %s0, 1024, %s19, [#allocation4]
    $region5: #{tpu_custom_call.1} parent=1 // pred_fallthru
      _
    // Predicated region
    $region6: #{tpu_custom_call.1} parent=1 // pred_check
      _
    $region7: #{tpu_custom_call.1} parent=1 // pred_check_branch
      %23 = sbr.rel (0) target = $region9
    $region8: #{tpu_custom_call.1} parent=1 // pred_region
      %s25 = ssub.s32 128, 128
      %26 = vsyncadd [#allocation7], %s25
      %s28 = sshll.u32 [#allocation6], 4
      %s29 = int_to_ptr.vmem [resolvable:$true] %s28
      %31 = dma.hbm_to_vmem [thread:$0]  %s1, 128, %s29, [#allocation7]
    $region9: #{tpu_custom_call.1} parent=1 // pred_fallthru
      _
    // Predicated region
    $region10: #{tpu_custom_call.1} parent=1 // pred_check
      _
    $region11: #{tpu_custom_call.1} parent=1 // pred_check_branch
      %33 = sbr.rel (0) target = $region13
    $region12: #{tpu_custom_call.1} parent=1 // pred_region
      _
    $region13: #{tpu_custom_call.1} parent=1 // pred_fallthru
      _
    // Predicated region
    $region14: #{tpu_custom_call.1} parent=1 // pred_check
      _
    $region15: #{tpu_custom_call.1} parent=1 // pred_check_branch
      %35 = sbr.rel (0) target = $region17
    $region16: #{tpu_custom_call.1} parent=1 // pred_region
      %36 = dma.done [#allocation4], 1024
    $region17: #{tpu_custom_call.1} parent=1 // pred_fallthru
      _
    // Predicated region
    $region18: #{tpu_custom_call.1} parent=1 // pred_check
      _
    $region19: #{tpu_custom_call.1} parent=1 // pred_check_branch
      %38 = sbr.rel (0) target = $region21
    $region20: #{tpu_custom_call.1} parent=1 // pred_region
      %39 = dma.done [#allocation7], 128
    $region21: #{tpu_custom_call.1} parent=1 // pred_fallthru
      _
    %v40 = vld [vmem:[#allocation3] sm:$0xff]
    %v41 = vld [vmem:[#allocation6] sm:$0x1]
    %v43 = vlaneseq
    %v44 = vshrl.u32 %v43, 7
    %v45 = vsub.s32 0, %v44
    %v46 = vrot.slane %v41, %v45
    %v48 = vmul.f32 %v40, %v46
    %v49 = vld [vmem:[#allocation3 + $0x8] sm:$0xff]
    %v50 = vld [vmem:[#allocation6 + $0x1] sm:$0x1]
    %v52 = vlaneseq
    %v53 = vshrl.u32 %v52, 7
    %v54 = vsub.s32 0, %v53
    %v55 = vrot.slane %v50, %v54
    %v57 = vmul.f32 %v49, %v55
    %v58 = vadd.f32 %v48, %v57
    %v59 = vld [vmem:[#allocation3 + $0x10] sm:$0xff]
    %v60 = vld [vmem:[#allocation6 + $0x2] sm:$0x1]
    %v62 = vlaneseq
    %v63 = vshrl.u32 %v62, 7
    %v64 = vsub.s32 0, %v63
    %v65 = vrot.slane %v60, %v64
    %v67 = vmul.f32 %v59, %v65
    %v68 = vadd.f32 %v58, %v67
    %v69 = vld [vmem:[#allocation3 + $0x18] sm:$0xff]
    %v70 = vld [vmem:[#allocation6 + $0x3] sm:$0x1]
    %v72 = vlaneseq
    %v73 = vshrl.u32 %v72, 7
    %v74 = vsub.s32 0, %v73
    %v75 = vrot.slane %v70, %v74
    %v77 = vmul.f32 %v69, %v75
    %v78 = vadd.f32 %v68, %v77
    %v79 = vld [vmem:[#allocation3 + $0x20] sm:$0xff]
    %v80 = vld [vmem:[#allocation6 + $0x4] sm:$0x1]
    %v82 = vlaneseq
    %v83 = vshrl.u32 %v82, 7
    %v84 = vsub.s32 0, %v83
    %v85 = vrot.slane %v80, %v84
    %v87 = vmul.f32 %v79, %v85
    %v88 = vadd.f32 %v78, %v87
    %v89 = vld [vmem:[#allocation3 + $0x28] sm:$0xff]
    %v90 = vld [vmem:[#allocation6 + $0x5] sm:$0x1]
    %v92 = vlaneseq
    %v93 = vshrl.u32 %v92, 7
    %v94 = vsub.s32 0, %v93
    %v95 = vrot.slane %v90, %v94
    %v97 = vmul.f32 %v89, %v95
    %v98 = vadd.f32 %v88, %v97
    %v99 = vld [vmem:[#allocation3 + $0x30] sm:$0xff]
    %v100 = vld [vmem:[#allocation6 + $0x6] sm:$0x1]
    %v102 = vlaneseq
    %v103 = vshrl.u32 %v102, 7
    %v104 = vsub.s32 0, %v103
    %v105 = vrot.slane %v100, %v104
    %v107 = vmul.f32 %v99, %v105
    %v108 = vadd.f32 %v98, %v107
    %v109 = vld [vmem:[#allocation3 + $0x38] sm:$0xff]
    %v110 = vld [vmem:[#allocation6 + $0x7] sm:$0x1]
    %v112 = vlaneseq
    %v113 = vshrl.u32 %v112, 7
    %v114 = vsub.s32 0, %v113
    %v115 = vrot.slane %v110, %v114
    %v117 = vmul.f32 %v109, %v115
    %v118 = vadd.f32 %v108, %v117
    %119 = vadd.xlane.f32.xlu0 %v118
    %v120 = vpop.xlane.xlu0 %119
    %s121 = sld [smem:[#allocation2]]
    %v122 = vstv %s121
    %v123 = vadd.f32 %v120, %v122
    %v124 = vxor.u32 %v123, 2147483648
    %v125 = vmul.f32 %v124, 1.442695
    %v126 = vpow.pop %v125
    %v127 = vadd.f32 %v126, 1.0
    %v128 = vrcp.pop %v127
    %v129 = vmul.f32 1.0, %v128
    %v131 = vlaneseq
    %v132 = vand.u32 %v131, 127
    %v133 = vlaneseq
    %v134 = vshrl.u32 %v133, 7
    %v135 = vsub.s32 %v132, %v134
    %v136 = vrot.slane %v129, %v135
    %vm138 = vcmask 57344
    %139 = vst.msk [vmem:[#allocation8] sm:$0x1] %vm138, %v136
    // Predicated region
    $region22: #{tpu_custom_call.1} parent=1 // pred_check
      _
    $region23: #{tpu_custom_call.1} parent=1 // pred_check_branch
      %141 = sbr.rel (0) target = $region25
    $region24: #{tpu_custom_call.1} parent=1 // pred_region
      %s143 = ssub.s32 16, 16
      %144 = vsyncadd [#allocation5], %s143
      %s146 = sshll.u32 [#allocation8], 4
      %s147 = int_to_ptr.vmem [resolvable:$true] %s146
      %149 = dma.vmem_to_hbm [thread:$0]  %s147, 16, %s3, [#allocation5]
    $region25: #{tpu_custom_call.1} parent=1 // pred_fallthru
      _
    // Predicated region
    $region26: #{tpu_custom_call.1} parent=1 // pred_check
      _
    $region27: #{tpu_custom_call.1} parent=1 // pred_check_branch
      %151 = sbr.rel (0) target = $region29
    $region28: #{tpu_custom_call.1} parent=1 // pred_region
      %152 = dma.done [#allocation5], 16
    $region29: #{tpu_custom_call.1} parent=1 // pred_fallthru
      _
    %153 = vsyncpa [#allocation4], 1
    %154 = vsyncpa [#allocation7], 1
    %155 = vsyncpa [#allocation5], 1

</llo_original>
